<compile_context>
chip_gen: v7x
topology: tpu7x:2x2x1
jax: 0.10.0
libtpu: 0.0.40
codegen_flags: <defaults>
</compile_context>

<pallas_src>
import jax
import jax.numpy as jnp
from jax.experimental import pallas as pl
from jax.experimental.pallas import tpu as pltpu


def _relu_kernel(x_ref, o_ref):
    # Elementwise max(x, 0) on the current VMEM tile (one VPU op; DMA-bound).
    o_ref[...] = jnp.maximum(x_ref[...], 0)


def _round_down(x: int, m: int) -> int:
    return (x // m) * m


def _vmem_limit_bytes() -> int:
    """Generation-aware scoped-VMEM budget for Mosaic."""
    try:
        cap = pltpu.get_tpu_info().vmem_capacity_bytes
    except Exception:
        cap = 64 * 1024 * 1024  # conservative: assume v7x-class per-TC VMEM
    if cap <= 64 * 1024 * 1024:
        # v7x: 64 MiB per TensorCore -> 48 MiB leaves headroom for Mosaic
        # internal scratch (4 x 8 MiB double-buffered in+out = 32 MiB).
        return 48 * 1024 * 1024
    # v5e / v6e: 128 MiB physical VMEM.
    return 64 * 1024 * 1024


def my_relu(x: jax.Array,
            *,
            target_tile_bytes: int = 8 * 1024 * 1024,
            min_kernel_bytes: int = 1 * 1024 * 1024) -> jax.Array:
    """Pallas ReLU matching torch.nn.ReLU() semantics (elementwise, same shape/dtype)."""
    orig_shape = x.shape
    dtype = x.dtype
    n = x.size
    if n == 0:
        return x

    itemsize = jnp.dtype(dtype).itemsize

    # Small-input fast path: launch + DMA-setup overhead dominates and blocks
    # XLA fusion, so plain jnp.maximum is strictly better below ~1 MiB.
    if n * itemsize < min_kernel_bytes:
        return jnp.maximum(x, 0).astype(dtype).reshape(orig_shape)

    # Native sublane packing: 8 rows for 32-bit, 16 for bf16, 32 for int8/fp8.
    sublane = max(8, 32 // itemsize)

    # Widest lane count that divides n exactly -> no tail at all; otherwise
    # fall back to 128 lanes (still unmasked full-vreg stores) and handle the
    # <128-element tail outside the kernel.
    lanes = 128
    for cand in (1024, 512, 256, 128):
        if n % cand == 0:
            lanes = cand
            break
    tail = n % lanes
    n_main = n - tail

    flat = x.reshape(-1)

    if n_main == 0:
        # Degenerate ragged case (n < 128): nothing lane-aligned to stream.
        return jnp.maximum(x, 0).astype(dtype).reshape(orig_shape)

    rows = n_main // lanes
    x2d = flat[:n_main].reshape(rows, lanes)

    # Tile sizing:
    #  * cap at ~target_tile_bytes so double-buffered in+out (4 x tile) fits
    #    the scoped-VMEM budget on every generation,
    #  * but also aim for >= ~8 grid steps so the pipeline actually overlaps
    #    DMA with compute and both v7x TensorCores are fed.
    tile_r_cap = max(sublane,
                     _round_down(target_tile_bytes // (lanes * itemsize), sublane))
    tile_r = min(tile_r_cap, max(sublane, _round_down(rows // 8, sublane)))
    if tile_r >= rows:
        tile_r = rows  # tiny array: single full-extent block (always legal)
    grid = (pl.cdiv(rows, tile_r),)  # ragged last block handled by Pallas masking

    out2d = pl.pallas_call(
        _relu_kernel,
        out_shape=jax.ShapeDtypeStruct((rows, lanes), dtype),
        grid_spec=pltpu.PrefetchScalarGridSpec(
            num_scalar_prefetch=0,
            grid=grid,
            in_specs=[pl.BlockSpec((tile_r, lanes), lambda i: (i, 0))],
            out_specs=pl.BlockSpec((tile_r, lanes), lambda i: (i, 0)),
        ),
        compiler_params=pltpu.CompilerParams(
            # "parallel" lets Mosaic shard grid steps across both v7x TCs.
            dimension_semantics=("parallel",),
            vmem_limit_bytes=_vmem_limit_bytes(),
        ),
    )(x2d)

    out_flat = out2d.reshape(-1)
    if tail:
        # Tail is < lanes elements: compute it directly and stitch it back
        # (avoids the old full-array pad + post-slice HBM round trips).
        tail_out = jnp.maximum(flat[n_main:], 0).astype(dtype)
        out_flat = jnp.concatenate([out_flat, tail_out])
    return out_flat.reshape(orig_shape)


if __name__ == "__main__":
    key = jax.random.PRNGKey(0)
    # NCHW input, like the PyTorch module would receive.
    x = jax.random.normal(key, (2, 4, 16, 16), dtype=jnp.float32)
    ref = jnp.maximum(x, 0.0)

    # Force the Pallas path on the small demo tensor (it is below the
    # fast-path threshold that would otherwise route it to jnp.maximum).
    out = my_relu(x, min_kernel_bytes=0)
    jax.block_until_ready(out)
    assert out.shape == x.shape and out.dtype == x.dtype
    assert jnp.allclose(out, ref), "mismatch vs reference ReLU (kernel path)"

    # Default path: small input takes the fused jnp.maximum fast path.
    out_fast = my_relu(x)
    jax.block_until_ready(out_fast)
    assert jnp.allclose(out_fast, ref), "mismatch vs reference ReLU (fast path)"

    # Ragged element count (3*7*11*5 = 1155 = 9*128 + 3): exercises the
    # lane-aligned prefix kernel + scalar tail stitching and a partial block.
    x2 = jax.random.normal(jax.random.PRNGKey(1), (3, 7, 11, 5), dtype=jnp.float32)
    out2 = my_relu(x2, min_kernel_bytes=0)
    jax.block_until_ready(out2)
    assert jnp.allclose(out2, jnp.maximum(x2, 0.0)), "mismatch vs reference ReLU (ragged path)"

    print("KERNEL_OK")
</pallas_src>

<mosaic_0001>
module attributes {stable_mosaic.version = 11 : i64} {
  func.func @_relu_kernel(%arg0: i32, %arg1: memref<2x1024xf32, #tpu.memory_space<vmem>>, %arg2: memref<2x1024xf32, #tpu.memory_space<vmem>>) attributes {dimension_semantics = [#tpu.dimension_semantics<parallel>], iteration_bounds = array<i64: 1>, scalar_prefetch = 0 : i64, scratch_operands = 0 : i64, tpu.core_type = #tpu.core_type<tc>, window_params = [{transform_indices = @transform_0, window_bounds = array<i64: 2, 1024>}, {transform_indices = @transform_1, window_bounds = array<i64: 2, 1024>}]} {
    %c0 = arith.constant 0 : index
    %c0_0 = arith.constant 0 : index
    %0 = vector.load %arg1[%c0, %c0_0] : memref<2x1024xf32, #tpu.memory_space<vmem>>, vector<2x1024xf32>
    %cst = arith.constant 0.000000e+00 : f32
    %1 = vector.broadcast %cst : f32 to vector<2x1024xf32>
    %2 = arith.maximumf %0, %1 : vector<2x1024xf32>
    %c0_1 = arith.constant 0 : index
    %c0_2 = arith.constant 0 : index
    %3 = vector.load %arg2[%c0_1, %c0_2] : memref<2x1024xf32, #tpu.memory_space<vmem>>, vector<2x1024xf32>
    tpu.vector_store %arg2[%c0_1, %c0_2], %2 {strides = array<i32>} : memref<2x1024xf32, #tpu.memory_space<vmem>>, vector<2x1024xf32>,
    return
  }
  func.func @transform_0(%arg0: i32) -> (i32, i32) {
    %c0_i32 = arith.constant 0 : i32
    %c0_i32_0 = arith.constant 0 : i32
    return %arg0, %c0_i32 : i32, i32
  }
  func.func @transform_1(%arg0: i32) -> (i32, i32) {
    %c0_i32 = arith.constant 0 : i32
    %c0_i32_0 = arith.constant 0 : i32
    return %arg0, %c0_i32 : i32, i32
  }
}

</mosaic_0001>

<llo_original>
// kernel: tpu_custom_call.1
$region0: #{tpu_custom_call.1}
  #allocation0 [shape = 'u32[]', space=smem, size = 0x4, offset = 0x4, fixed_abs, tag = 'smem constant byte address 0x4 - core index']
  #allocation1 [shape = 'u32[144,128]{1,0:T(1,128)}', space=vmem, size = 0x12000, scoped, tag = 'internal scratch']
  %s0 = inlined_call_operand.hbm [shape: f32[2,1024], index: 0, kind: input, shape index: {}]
  %s1 = inlined_call_operand.hbm [shape: f32[2,1024], index: 1, kind: output, shape index: {}]
  %s2 = sld [smem:[#allocation0]]
  $region18: #{tpu_custom_call.1} parent=0
    _
  %s4 = ssub.s32 1, %s2
  %s5 = scalar_select 0, %s4, %s2
  $region1: #{tpu_custom_call.1} parent=0
    #allocation2 [shape = 'u8[8192]{0}', space=vmem, size = 0x2000, scoped, tag = 'input window, operand 0, single buffered']
    #allocation3 [shape = 's32[1]{0}', space=sflag, size = 0x4, scoped, tag = 'scoped memory for tpu_custom_call.1']
    #allocation4 [shape = 's32[1]{0}', space=sflag, size = 0x4, scoped, tag = 'scoped memory for tpu_custom_call.1']
    #allocation5 [shape = 'u8[8192]{0}', space=vmem, size = 0x2000, scoped, tag = 'output window, operand 0, single buffered']
    %6 = vsyncpa [#allocation3], 0
    %7 = vsyncpa [#allocation4], 0
    // Predicated region
    $region2: #{tpu_custom_call.1} parent=1 // pred_check
      _
    $region3: #{tpu_custom_call.1} parent=1 // pred_check_branch
      %9 = sbr.rel (0) target = $region5
    $region4: #{tpu_custom_call.1} parent=1 // pred_region
      %s11 = ssub.s32 256, 256
      %12 = vsyncadd [#allocation3], %s11
      %s14 = sshll.u32 [#allocation2], 4
      %s15 = int_to_ptr.vmem [resolvable:$true] %s14
      %17 = dma.hbm_to_vmem [thread:$0]  %s0, 256, %s15, [#allocation3]
    $region5: #{tpu_custom_call.1} parent=1 // pred_fallthru
      _
    // Predicated region
    $region6: #{tpu_custom_call.1} parent=1 // pred_check
      _
    $region7: #{tpu_custom_call.1} parent=1 // pred_check_branch
      %19 = sbr.rel (0) target = $region9
    $region8: #{tpu_custom_call.1} parent=1 // pred_region
      %20 = dma.done [#allocation3], 256
    $region9: #{tpu_custom_call.1} parent=1 // pred_fallthru
      _
    %v21 = vld [vmem:[#allocation2] sm:$0xff]
    %v22 = vld [vmem:[#allocation2 + $0x8] sm:$0xff]
    %v23 = vmax.f32 %v21, 0.0
    %v24 = vmax.f32 %v22, 0.0
    %25 = vst [vmem:[#allocation5] sm:$0xff] %v23
    %26 = vst [vmem:[#allocation5 + $0x8] sm:$0xff] %v24
    // Predicated region
    $region10: #{tpu_custom_call.1} parent=1 // pred_check
      _
    $region11: #{tpu_custom_call.1} parent=1 // pred_check_branch
      %28 = sbr.rel (0) target = $region13
    $region12: #{tpu_custom_call.1} parent=1 // pred_region
      %s30 = ssub.s32 256, 256
      %31 = vsyncadd [#allocation4], %s30
      %s33 = sshll.u32 [#allocation5], 4
      %s34 = int_to_ptr.vmem [resolvable:$true] %s33
      %36 = dma.vmem_to_hbm [thread:$0]  %s34, 256, %s1, [#allocation4]
    $region13: #{tpu_custom_call.1} parent=1 // pred_fallthru
      _
    // Predicated region
    $region14: #{tpu_custom_call.1} parent=1 // pred_check
      _
    $region15: #{tpu_custom_call.1} parent=1 // pred_check_branch
      %38 = sbr.rel (0) target = $region17
    $region16: #{tpu_custom_call.1} parent=1 // pred_region
      %39 = dma.done [#allocation4], 256
    $region17: #{tpu_custom_call.1} parent=1 // pred_fallthru
      _
    %40 = vsyncpa [#allocation3], 1
    %41 = vsyncpa [#allocation4], 1

</llo_original>
